<compile_context>
chip_gen: v6e
topology: v6e:2x2x1
jax: 0.10.0
libtpu: 0.0.40
codegen_flags: <defaults>
</compile_context>

<pallas_src>
import jax
import jax.numpy as jnp
from jax.experimental import pallas as pl
from jax.experimental.pallas import tpu as pltpu


def _circular_filter_kernel(dist2_ref, r2_ref, img_ref, out_ref):
    """dist2_ref: VMEM (1, TS)  int32 — squared distance from image center
       r2_ref   : VMEM (TB, 1)  int32 — effective squared radius per image
       img_ref  : VMEM (TB, TS)       — input image rows (flattened spatial)
       out_ref  : VMEM (TB, TS)       — output image rows
    """
    img = img_ref[...]
    keep = dist2_ref[...] <= r2_ref[...]          # (1,TS) vs (TB,1) -> (TB,TS)
    # Multiply (not jnp.where) so NaN/Inf outside the circle propagate exactly
    # like the PyTorch reference `images * mask_batch`.
    out_ref[...] = img * keep.astype(img.dtype)


def _choose_tiles(B, HW, itemsize, max_block_bytes):
    """Pick (tb, ts) block dims honoring the (8,128) rule and the byte budget."""
    # Fast path: whole problem in one block -> grid (1,1), no step overhead.
    if B * HW * itemsize <= max_block_bytes:
        return B, HW

    # Split the batch axis first (keeps spatial lane-dense, full-row stores).
    # tb must be a multiple of 8 that divides B; bound it by the byte budget.
    row_bytes = HW * itemsize
    batch_divs = [tb for tb in range(8, B, 8) if B % tb == 0]
    fitting = [tb for tb in batch_divs if tb * row_bytes <= max_block_bytes]
    if fitting:
        return max(fitting), HW

    # Batch split alone is not enough (rows too wide or no legal divisor):
    # also split the spatial axis when it is a multiple of 128.
    tb = min(batch_divs) if batch_divs else B
    if HW % 128 == 0:
        spat_divs = [ts for ts in range(128, HW, 128) if HW % ts == 0]
        fitting = [ts for ts in spat_divs
                   if tb * ts * itemsize <= max_block_bytes]
        if fitting:
            return tb, max(fitting)
        if spat_divs:
            return tb, min(spat_divs)

    # Last resort: smallest legal block (may exceed the budget, stays correct).
    return tb, HW


def circular_filter_augmentation(images, apply_mask, radii,
                                 *, max_block_bytes=6 * 1024 * 1024,
                                 donate_images=False):
    """images: (B, H, W) float; apply_mask: (B,) bool; radii: (B,) int."""
    B, H, W = images.shape
    HW = H * W
    itemsize = images.dtype.itemsize
    imgs2d = images.reshape(B, HW)

    # Fold the apply flag into an effective squared radius: pass-through
    # batches get a threshold >= every possible dist2, keeping all pixels.
    r2 = radii.astype(jnp.int32) ** 2
    r2_eff = jnp.where(apply_mask, r2, jnp.int32(H * H + W * W))
    r2_eff = r2_eff.astype(jnp.int32).reshape(B, 1)

    # Batch-invariant squared distance from the image center, flattened so the
    # spatial axis sits on the lane dimension. Computed once, stays resident.
    y, x = jnp.meshgrid(jnp.arange(H, dtype=jnp.int32),
                        jnp.arange(W, dtype=jnp.int32), indexing="ij")
    dist2 = ((x - W // 2) ** 2 + (y - H // 2) ** 2).astype(jnp.int32)
    dist2 = dist2.reshape(1, HW)

    tb, ts = _choose_tiles(B, HW, itemsize, max_block_bytes)
    grid = (B // tb, HW // ts)

    grid_spec = pltpu.PrefetchScalarGridSpec(
        num_scalar_prefetch=0,
        grid=grid,
        in_specs=[
            pl.BlockSpec((1, ts), lambda i, j: (0, j)),    # dist2 (resident)
            pl.BlockSpec((tb, 1), lambda i, j: (i, 0)),    # per-image r2_eff
            pl.BlockSpec((tb, ts), lambda i, j: (i, j)),   # image slab
        ],
        out_specs=pl.BlockSpec((tb, ts), lambda i, j: (i, j)),
    )

    cost = pl.CostEstimate(
        flops=B * HW,                                      # 1 mul per pixel
        transcendentals=0,
        bytes_accessed=2 * B * HW * itemsize + HW * 4 + B * 4,
    )

    out2d = pl.pallas_call(
        _circular_filter_kernel,
        out_shape=jax.ShapeDtypeStruct((B, HW), images.dtype),
        grid_spec=grid_spec,
        compiler_params=pltpu.CompilerParams(
            # Only the batch axis is megacore-sharded (v7x); spatial is a loop.
            dimension_semantics=("parallel", "arbitrary"),
            # Explicit 32 MiB: needed on v5e (16 MiB scoped default), safe on
            # v7x (64 MiB physical) with <= ~24 MiB double-buffered blocks.
            vmem_limit_bytes=32 * 1024 * 1024,
        ),
        cost_estimate=cost,
        input_output_aliases=({2: 0} if donate_images else {}),
    )(dist2, r2_eff, imgs2d)
    return out2d.reshape(B, H, W)


def circular_filter_reference(images, apply_mask, radii):
    """Pure-JAX reference mirroring the PyTorch forward semantics."""
    B, H, W = images.shape
    y, x = jnp.meshgrid(jnp.arange(H), jnp.arange(W), indexing="ij")
    dist2 = (x - W // 2) ** 2 + (y - H // 2) ** 2
    mask = dist2[None, :, :] <= (radii.astype(jnp.int32)[:, None, None] ** 2)
    masked = images * mask.astype(images.dtype)
    return jnp.where(apply_mask[:, None, None], masked, images)


if __name__ == "__main__":
    # Deterministic setup mirroring the module's __init__ / forward RNG draws.
    # TODO(synk): the module draws apply_mask/radii with torch.rand inside
    # forward; here the equivalent draws are done host-side with jax.random.
    radius_range = (0.25, 0.75)
    p = 0.5

    B, H, W = 16, 16, 16
    key = jax.random.PRNGKey(0)
    k_img, k_apply, k_rad = jax.random.split(key, 3)

    images = jax.random.normal(k_img, (B, H, W), dtype=jnp.float32)

    # apply_mask = rand(B) < p
    apply_mask = jax.random.uniform(k_apply, (B,)) < p
    # random_radii = (rand(B)*(hi-lo)+lo) * min(H,W); .int() // 2
    rr = (jax.random.uniform(k_rad, (B,)) *
          (radius_range[1] - radius_range[0]) + radius_range[0]) * min(H, W)
    radii = (rr.astype(jnp.int32) // 2).astype(jnp.int32)

    out = circular_filter_augmentation(images, apply_mask, radii)
    out = jax.block_until_ready(out)

    ref = circular_filter_reference(images, apply_mask, radii)
    assert out.shape == images.shape and out.dtype == images.dtype
    assert jnp.allclose(out, ref), "Pallas kernel mismatch vs reference"

    print("KERNEL_OK")
</pallas_src>

<mosaic_0001>
module attributes {stable_mosaic.version = 11 : i64} {
  func.func @_circular_filter_kernel(%arg0: i32, %arg1: i32, %arg2: memref<1x256xi32, #tpu.memory_space<vmem>>, %arg3: memref<16x1xi32, #tpu.memory_space<vmem>>, %arg4: memref<16x256xf32, #tpu.memory_space<vmem>>, %arg5: memref<16x256xf32, #tpu.memory_space<vmem>>) attributes {dimension_semantics = [#tpu.dimension_semantics<parallel>, #tpu.dimension_semantics<arbitrary>], iteration_bounds = array<i64: 1, 1>, scalar_prefetch = 0 : i64, scratch_operands = 0 : i64, tpu.core_type = #tpu.core_type<tc>, window_params = [{transform_indices = @transform_0, window_bounds = array<i64: 1, 256>}, {transform_indices = @transform_1, window_bounds = array<i64: 16, 1>}, {transform_indices = @transform_2, window_bounds = array<i64: 16, 256>}, {transform_indices = @transform_3, window_bounds = array<i64: 16, 256>}]} {
    %c0 = arith.constant 0 : index
    %c0_0 = arith.constant 0 : index
    %0 = vector.load %arg4[%c0, %c0_0] : memref<16x256xf32, #tpu.memory_space<vmem>>, vector<16x256xf32>
    %c0_1 = arith.constant 0 : index
    %c0_2 = arith.constant 0 : index
    %1 = vector.load %arg2[%c0_1, %c0_2] : memref<1x256xi32, #tpu.memory_space<vmem>>, vector<1x256xi32>
    %c0_3 = arith.constant 0 : index
    %c0_4 = arith.constant 0 : index
    %2 = vector.load %arg3[%c0_3, %c0_4] : memref<16x1xi32, #tpu.memory_space<vmem>>, vector<16x1xi32>
    %3 = vector.broadcast %1 : vector<1x256xi32> to vector<16x256xi32>
    %4 = vector.broadcast %2 : vector<16x1xi32> to vector<16x256xi32>
    %5 = arith.cmpi sle, %3, %4 : vector<16x256xi32>
    %6 = arith.extui %5 : vector<16x256xi1> to vector<16x256xi32>
    %7 = arith.sitofp %6 : vector<16x256xi32> to vector<16x256xf32>
    %8 = arith.mulf %0, %7 : vector<16x256xf32>
    %c0_5 = arith.constant 0 : index
    %c0_6 = arith.constant 0 : index
    %9 = vector.load %arg5[%c0_5, %c0_6] : memref<16x256xf32, #tpu.memory_space<vmem>>, vector<16x256xf32>
    tpu.vector_store %arg5[%c0_5, %c0_6], %8 {strides = array<i32>} : memref<16x256xf32, #tpu.memory_space<vmem>>, vector<16x256xf32>,
    return
  }
  func.func @transform_0(%arg0: i32, %arg1: i32) -> (i32, i32) {
    %c0_i32 = arith.constant 0 : i32
    %c0_i32_0 = arith.constant 0 : i32
    return %c0_i32, %arg1 : i32, i32
  }
  func.func @transform_1(%arg0: i32, %arg1: i32) -> (i32, i32) {
    %c0_i32 = arith.constant 0 : i32
    %c0_i32_0 = arith.constant 0 : i32
    return %arg0, %c0_i32 : i32, i32
  }
  func.func @transform_2(%arg0: i32, %arg1: i32) -> (i32, i32) {
    %c0_i32 = arith.constant 0 : i32
    return %arg0, %arg1 : i32, i32
  }
  func.func @transform_3(%arg0: i32, %arg1: i32) -> (i32, i32) {
    %c0_i32 = arith.constant 0 : i32
    return %arg0, %arg1 : i32, i32
  }
}

</mosaic_0001>

<llo_original>
// kernel: tpu_custom_call.1
$region0: #{tpu_custom_call.1}
  #allocation0 [shape = 'u32[]', space=smem, size = 0x4, offset = 0x4, fixed_abs, tag = 'smem constant byte address 0x4 - core index']
  #allocation1 [shape = 'u32[144,128]{1,0:T(1,128)}', space=vmem, size = 0x12000, scoped, tag = 'internal scratch']
  %s0 = inlined_call_operand.vmem [shape: s32[1,256], index: 0, kind: input, shape index: {}]
  %s1 = inlined_call_operand.vmem [shape: s32[16,1], index: 1, kind: input, shape index: {}]
  %s2 = inlined_call_operand.hbm [shape: f32[16,256], index: 2, kind: input, shape index: {}]
  %s3 = inlined_call_operand.hbm [shape: f32[16,256], index: 3, kind: output, shape index: {}]
  %s4 = sld [smem:[#allocation0]]
  $region26: #{tpu_custom_call.1} parent=0
    _
  %s6 = ssub.s32 1, %s4
  %s7 = scalar_select 0, %s6, %s4
  $region1: #{tpu_custom_call.1} parent=0
    #allocation2 [shape = 'u8[16384]{0}', space=vmem, size = 0x4000, scoped, tag = 'input window, operand 2, single buffered']
    #allocation3 [shape = 's32[1]{0}', space=sflag, size = 0x4, scoped, tag = 'scoped memory for tpu_custom_call.1']
    #allocation4 [shape = 's32[1]{0}', space=sflag, size = 0x4, scoped, tag = 'scoped memory for tpu_custom_call.1']
    #allocation5 [shape = 'u8[16384]{0}', space=vmem, size = 0x4000, scoped, tag = 'output window, operand 0, single buffered']
    %8 = vsyncpa [#allocation3], 0
    %9 = vsyncpa [#allocation4], 0
    // Predicated region
    $region2: #{tpu_custom_call.1} parent=1 // pred_check
      _
    $region3: #{tpu_custom_call.1} parent=1 // pred_check_branch
      %11 = sbr.rel (0) target = $region5
    $region4: #{tpu_custom_call.1} parent=1 // pred_region
      _
    $region5: #{tpu_custom_call.1} parent=1 // pred_fallthru
      _
    // Predicated region
    $region6: #{tpu_custom_call.1} parent=1 // pred_check
      _
    $region7: #{tpu_custom_call.1} parent=1 // pred_check_branch
      %13 = sbr.rel (0) target = $region9
    $region8: #{tpu_custom_call.1} parent=1 // pred_region
      _
    $region9: #{tpu_custom_call.1} parent=1 // pred_fallthru
      _
    // Predicated region
    $region10: #{tpu_custom_call.1} parent=1 // pred_check
      _
    $region11: #{tpu_custom_call.1} parent=1 // pred_check_branch
      %15 = sbr.rel (0) target = $region13
    $region12: #{tpu_custom_call.1} parent=1 // pred_region
      %s17 = ssub.s32 512, 512
      %18 = vsyncadd [#allocation3], %s17
      %s19 = sshll.u32 [#allocation2], 4
      %s20 = int_to_ptr.vmem [resolvable:$true] %s19
      %25 = dma.hbm_to_vmem [thread:$0]  %s2, 512, %s20, [#allocation3], 256, 256, 16
    $region13: #{tpu_custom_call.1} parent=1 // pred_fallthru
      _
    // Predicated region
    $region14: #{tpu_custom_call.1} parent=1 // pred_check
      _
    $region15: #{tpu_custom_call.1} parent=1 // pred_check_branch
      %27 = sbr.rel (0) target = $region17
    $region16: #{tpu_custom_call.1} parent=1 // pred_region
      %28 = dma.done [#allocation3], 512
    $region17: #{tpu_custom_call.1} parent=1 // pred_fallthru
      _
    %v29 = vld [vmem:[#allocation2] sm:$0xff]
    %v30 = vld [vmem:[#allocation2 + $0x8] sm:$0xff]
    %v31 = vld [vmem:[#allocation2 + $0x10] sm:$0xff]
    %v32 = vld [vmem:[#allocation2 + $0x18] sm:$0xff]
    %v33 = vld [vmem:[%s0] sm:$0x3]
    %v34 = vld [vmem:[%s1] sm:$0xff]
    %v35 = vld [vmem:[%s1 + $0x8] sm:$0xff]
    %v36 = vlaneseq
    %v37 = vshrl.u32 %v36, 7
    %v38 = vsub.s32 0, %v37
    %v39 = vrot.slane %v33, %v38
    %v40 = vlaneseq
    %v41 = vshrl.u32 %v40, 7
    %v42 = vsub.s32 1, %v41
    %v43 = vrot.slane %v33, %v42
    %44 = vset.pattern.permute.xlu0 0
    %45 = vperm.xlu0 %44, %v34
    %v46 = vpop.permute.xlu0 %45
    %47 = vset.pattern.permute.xlu0 0
    %48 = vperm.xlu0 %47, %v35
    %v49 = vpop.permute.xlu0 %48
    %vm50 = vcmp.le.s32.totalorder %v39, %v46
    %vm51 = vcmp.le.s32.totalorder %v43, %v46
    %vm52 = vcmp.le.s32.totalorder %v39, %v49
    %vm53 = vcmp.le.s32.totalorder %v43, %v49
    %v54 = vsel %vm50, 1, 0
    %v55 = vsel %vm51, 1, 0
    %v56 = vsel %vm52, 1, 0
    %v57 = vsel %vm53, 1, 0
    %v58 = vcvt.s32.f32 %v54
    %v59 = vcvt.s32.f32 %v55
    %v60 = vcvt.s32.f32 %v56
    %v61 = vcvt.s32.f32 %v57
    %v62 = vmul.f32 %v29, %v58
    %v63 = vmul.f32 %v30, %v59
    %v64 = vmul.f32 %v31, %v60
    %v65 = vmul.f32 %v32, %v61
    %66 = vst [vmem:[#allocation5] sm:$0xff] %v62
    %67 = vst [vmem:[#allocation5 + $0x8] sm:$0xff] %v63
    %68 = vst [vmem:[#allocation5 + $0x10] sm:$0xff] %v64
    %69 = vst [vmem:[#allocation5 + $0x18] sm:$0xff] %v65
    // Predicated region
    $region18: #{tpu_custom_call.1} parent=1 // pred_check
      _
    $region19: #{tpu_custom_call.1} parent=1 // pred_check_branch
      %71 = sbr.rel (0) target = $region21
    $region20: #{tpu_custom_call.1} parent=1 // pred_region
      %s73 = ssub.s32 512, 512
      %74 = vsyncadd [#allocation4], %s73
      %s75 = sshll.u32 [#allocation5], 4
      %s76 = int_to_ptr.vmem [resolvable:$true] %s75
      %81 = dma.vmem_to_hbm [thread:$0]  %s76, 512, %s3, [#allocation4], 256, 256, 16
    $region21: #{tpu_custom_call.1} parent=1 // pred_fallthru
      _
    // Predicated region
    $region22: #{tpu_custom_call.1} parent=1 // pred_check
      _
    $region23: #{tpu_custom_call.1} parent=1 // pred_check_branch
      %83 = sbr.rel (0) target = $region25
    $region24: #{tpu_custom_call.1} parent=1 // pred_region
      %84 = dma.done [#allocation4], 512
    $region25: #{tpu_custom_call.1} parent=1 // pred_fallthru
      _
    %85 = vsyncpa [#allocation3], 1
    %86 = vsyncpa [#allocation4], 1

</llo_original>
